<compile_context>
chip_gen: v7x
topology: tpu7x:2x2x1
jax: 0.10.0
libtpu: 0.0.40
codegen_flags: <defaults>
</compile_context>

<pallas_src>
import functools

import jax
import jax.numpy as jnp
from jax.experimental import pallas as pl
from jax.experimental.pallas import tpu as pltpu

_LANE = 128
_SUBLANE = 8


def _round_up(x, m):
    return ((x + m - 1) // m) * m


def _device_kind():
    try:
        return jax.devices()[0].device_kind.lower()
    except Exception:
        return ""


def _num_tensorcores():
    # v7x exposes 2 TensorCores per chip; v5e/v6e have 1.
    kind = _device_kind()
    return 2 if ("v7" in kind or "tpu7" in kind) else 1


def _vmem_capacity_bytes():
    try:
        cap = int(pltpu.get_tpu_info().vmem_capacity_bytes)
        if cap > 0:
            return cap
    except Exception:
        pass
    kind = _device_kind()
    return (64 << 20) if ("v7" in kind or "tpu7" in kind) else (128 << 20)


def _pick_tile_b(B, D, itemsize, vmem_limit, sub):
    """Batch-tile rows, VMEM-budgeted (inputs are double-buffered; in-kernel
    f32 widening adds ~3 f32 temporaries on top of the 2x2 input buffers)."""
    per_row_vmem = D * (4 * itemsize + 12)          # 2 in x 2 buf + ~3 f32 temps
    tb_budget = int(vmem_limit * 0.6) // max(1, per_row_vmem)
    tb_target = (6 << 20) // max(1, D * itemsize)   # cap ~6 MiB per input tile
    tb = min(tb_budget, tb_target)
    tb = (tb // sub) * sub
    tb = min(tb, _round_up(B, sub))
    return max(sub, int(tb))


def _embedding_mse_kernel(pred_ref, tgt_ref, sq_out_ref, l2_out_ref, *,
                          normalize, B, tile_b, tiles_per_split, num_splits,
                          has_partial):
    if num_splits == 1:
        i = pl.program_id(0)
        tile_idx = i
    else:
        c = pl.program_id(0)          # core split (CORE_PARALLEL on v7x)
        i = pl.program_id(1)          # reduction step within the split
        tile_idx = c * tiles_per_split + i

    # Zero the per-split output-resident accumulators at the start of the
    # reduction axis.
    @pl.when(i == 0)
    def _():
        sq_out_ref[...] = jnp.zeros_like(sq_out_ref)
        l2_out_ref[...] = jnp.zeros_like(l2_out_ref)

    p = pred_ref[...].astype(jnp.float32)
    t = tgt_ref[...].astype(jnp.float32)

    # Spread each step's partial across lanes (keyed by step) so the
    # sequential dependent-add chain per lane is ~128x shorter.
    lane_ids = jax.lax.broadcasted_iota(jnp.int32, (1, _SUBLANE, _LANE), 2)
    lane_mask = lane_ids == (i % _LANE)

    def _accumulate(pp, tt):
        if normalize:
            # F.normalize: x / max(||x||, 1e-12) == x * rsqrt(max(sumsq, 1e-24))
            eps2 = jnp.float32(1e-24)
            pp = pp * jax.lax.rsqrt(
                jnp.maximum(jnp.sum(pp * pp, axis=1, keepdims=True), eps2))
            tt = tt * jax.lax.rsqrt(
                jnp.maximum(jnp.sum(tt * tt, axis=1, keepdims=True), eps2))
        d = pp - tt
        # Single per-row reduction reused for both outputs.
        row_sq = jnp.sum(d * d, axis=1, keepdims=True)            # (tile_b, 1)
        part_sq = jnp.sum(row_sq, axis=0, keepdims=True)          # (1, 1)
        part_l2 = jnp.sum(jnp.sqrt(row_sq), axis=0, keepdims=True)
        sq_out_ref[...] += jnp.where(lane_mask, part_sq, 0.0)
        l2_out_ref[...] += jnp.where(lane_mask, part_l2, 0.0)

    if not has_partial:
        # Fast path: every tile is fully valid, no masking anywhere.
        _accumulate(p, t)
    else:
        boundary = (tile_idx + 1) * tile_b > B

        @pl.when(jnp.logical_not(boundary))
        def _():
            _accumulate(p, t)

        @pl.when(boundary)
        def _():
            # Partial last tile (and fully-out-of-range duplicated tiles when
            # the tile count does not divide evenly across the split). Mask
            # BEFORE normalize so garbage rows can never produce NaN/Inf.
            row_idx = tile_idx * tile_b + jax.lax.broadcasted_iota(
                jnp.int32, (tile_b, 1), 0)
            valid = row_idx < B
            _accumulate(jnp.where(valid, p, 0.0), jnp.where(valid, t, 0.0))


def embedding_mse_loss(pred_embedding, target_embedding, *,
                       normalize: bool = False, tile_b=None, num_splits=None):
    """Pallas TPU equivalent of EmbeddingMSELoss.forward.

    Returns {'loss': scalar f32, 'l2_distance': scalar f32}.
    """
    assert pred_embedding.shape == target_embedding.shape
    assert pred_embedding.ndim == 2
    B, D = pred_embedding.shape
    assert B >= 1 and D >= 1

    itemsize = jnp.dtype(pred_embedding.dtype).itemsize
    sub = 16 if itemsize == 2 else 8          # bf16 packs 16 rows / vreg

    cores = _num_tensorcores()
    vmem_cap = _vmem_capacity_bytes()
    vmem_limit = max(min(vmem_cap * 3 // 4, 96 << 20), 16 << 20)

    if num_splits is None:
        num_splits = cores
    num_splits = max(1, int(num_splits))

    if tile_b is None:
        tile_b = _pick_tile_b(B, D, itemsize, vmem_limit, sub)
        if num_splits > 1:
            # Try to make the tile count a multiple of the split so no core
            # ever re-reads a clamped duplicate tile.
            nb0 = pl.cdiv(B, tile_b)
            if nb0 % num_splits:
                nb_even = _round_up(nb0, num_splits)
                tb2 = max(sub, _round_up(pl.cdiv(B, nb_even), sub))
                if pl.cdiv(B, tb2) % num_splits == 0:
                    tile_b = tb2
    tile_b = int(tile_b)

    nb = pl.cdiv(B, tile_b)                   # number of valid batch tiles
    num_splits = min(num_splits, nb)          # never more splits than tiles
    tiles_per_split = pl.cdiv(nb, num_splits)
    needs_clamp = num_splits * tiles_per_split > nb
    has_partial = (B % tile_b != 0) or needs_clamp

    kernel = functools.partial(
        _embedding_mse_kernel,
        normalize=normalize, B=B, tile_b=tile_b,
        tiles_per_split=tiles_per_split, num_splits=num_splits,
        has_partial=has_partial)

    if num_splits == 1:
        grid = (nb,)
        in_map = lambda i: (i, 0)
        out_map = lambda i: (0, 0, 0)
        dim_sems = (pltpu.ARBITRARY,)
    else:
        grid = (num_splits, tiles_per_split)
        if needs_clamp:
            # Clamp so overflow tiles never DMA out of range; their rows are
            # masked in-kernel.
            in_map = lambda c, i: (jnp.minimum(c * tiles_per_split + i, nb - 1), 0)
        else:
            in_map = lambda c, i: (c * tiles_per_split + i, 0)
        out_map = lambda c, i: (c, 0, 0)
        if cores >= num_splits:
            lead = getattr(pltpu, "CORE_PARALLEL", pltpu.PARALLEL)
        else:
            lead = pltpu.PARALLEL
        dim_sems = (lead, pltpu.ARBITRARY)

    grid_spec = pltpu.PrefetchScalarGridSpec(
        num_scalar_prefetch=0,
        grid=grid,
        in_specs=[
            pl.BlockSpec((tile_b, D), in_map),
            pl.BlockSpec((tile_b, D), in_map),
        ],
        out_specs=[
            pl.BlockSpec((1, _SUBLANE, _LANE), out_map),
            pl.BlockSpec((1, _SUBLANE, _LANE), out_map),
        ],
    )

    cost = pl.CostEstimate(
        flops=int((9 if normalize else 3) * B * D),
        transcendentals=int(B * (3 if normalize else 1)),
        bytes_accessed=int(2 * B * D * itemsize),
    )

    out_shape = (
        jax.ShapeDtypeStruct((num_splits, _SUBLANE, _LANE), jnp.float32),
        jax.ShapeDtypeStruct((num_splits, _SUBLANE, _LANE), jnp.float32),
    )

    def _run(sems):
        return pl.pallas_call(
            kernel,
            out_shape=out_shape,
            grid_spec=grid_spec,
            compiler_params=pltpu.CompilerParams(
                dimension_semantics=sems,
                vmem_limit_bytes=int(vmem_limit)),
            cost_estimate=cost,
        )(pred_embedding, target_embedding)

    if num_splits > 1 and dim_sems[0] is not pltpu.PARALLEL:
        # Prefer CORE_PARALLEL on multi-TC chips; fall back gracefully.
        try:
            sq_part, l2_part = _run(dim_sems)
        except Exception:
            sq_part, l2_part = _run((pltpu.PARALLEL, pltpu.ARBITRARY))
    else:
        sq_part, l2_part = _run(dim_sems)

    # Final cross-split / cross-lane reduction + normalization by TRUE counts.
    # (Partials live in sublane 0 of each split's block, spread across lanes.)
    sum_sq = jnp.sum(sq_part[:, 0, :])
    sum_l2 = jnp.sum(l2_part[:, 0, :])
    loss = sum_sq / jnp.float32(B * D)
    l2_distance = sum_l2 / jnp.float32(B)
    return {"loss": loss, "l2_distance": l2_distance}


def _reference(pred, tgt, normalize):
    p = pred.astype(jnp.float32)
    t = tgt.astype(jnp.float32)
    if normalize:
        eps = 1e-12
        p = p / jnp.maximum(jnp.linalg.norm(p, axis=1, keepdims=True), eps)
        t = t / jnp.maximum(jnp.linalg.norm(t, axis=1, keepdims=True), eps)
    loss = jnp.mean((p - t) ** 2)
    l2 = jnp.mean(jnp.linalg.norm(p - t, axis=1))
    return loss, l2


if __name__ == "__main__":
    key = jax.random.PRNGKey(0)
    ok = True
    # (B, D, tile_b, num_splits):
    #   case 2 forces a partial boundary tile,
    #   case 3 additionally forces the 2-way split + clamped overflow tile
    #   (runs serially on 1-TC chips, across both cores on v7x).
    test_cases = [
        (8, 128, None, None),
        (40, 96, 16, None),
        (40, 96, 16, 2),
    ]
    for (B, D, tb, ns) in test_cases:
        key, k1, k2 = jax.random.split(key, 3)
        pred = jax.random.normal(k1, (B, D), dtype=jnp.float32)
        tgt = jax.random.normal(k2, (B, D), dtype=jnp.float32)
        for normalize in (False, True):
            out = embedding_mse_loss(pred, tgt, normalize=normalize,
                                     tile_b=tb, num_splits=ns)
            jax.block_until_ready(out)
            ref_loss, ref_l2 = _reference(pred, tgt, normalize)
            ok &= bool(jnp.allclose(out["loss"], ref_loss, rtol=1e-5, atol=1e-5))
            ok &= bool(jnp.allclose(out["l2_distance"], ref_l2,
                                    rtol=1e-5, atol=1e-5))

    print("KERNEL_OK" if ok else "KERNEL_MISMATCH")
</pallas_src>

<mosaic_0001>
module attributes {stable_mosaic.version = 11 : i64} {
  func.func @_embedding_mse_kernel(%arg0: i32, %arg1: memref<8x128xf32, #tpu.memory_space<vmem>>, %arg2: memref<8x128xf32, #tpu.memory_space<vmem>>, %arg3: memref<1x8x128xf32, #tpu.memory_space<vmem>>, %arg4: memref<1x8x128xf32, #tpu.memory_space<vmem>>) attributes {dimension_semantics = [#tpu.dimension_semantics<arbitrary>], iteration_bounds = array<i64: 1>, scalar_prefetch = 0 : i64, scratch_operands = 0 : i64, tpu.core_type = #tpu.core_type<tc>, window_params = [{transform_indices = @transform_0, window_bounds = array<i64: 8, 128>}, {transform_indices = @transform_1, window_bounds = array<i64: 8, 128>}, {pipeline_mode = #tpu.pipeline_mode<synchronous>, transform_indices = @transform_2, window_bounds = array<i64: 1, 8, 128>}, {pipeline_mode = #tpu.pipeline_mode<synchronous>, transform_indices = @transform_3, window_bounds = array<i64: 1, 8, 128>}]} {
    %c0_i32 = arith.constant 0 : i32
    %0 = arith.cmpi eq, %arg0, %c0_i32 : i32
    %1 = arith.extui %0 : i1 to i32
    %c0_i32_0 = arith.constant 0 : i32
    %2 = arith.cmpi ne, %1, %c0_i32_0 : i32
    scf.if %2 {
      %cst_24 = arith.constant 0.000000e+00 : f32
      %41 = vector.broadcast %cst_24 : f32 to vector<1x8x128xf32>
      %c0_25 = arith.constant 0 : index
      %c0_26 = arith.constant 0 : index
      %c0_27 = arith.constant 0 : index
      %42 = vector.load %arg3[%c0_25, %c0_26, %c0_27] : memref<1x8x128xf32, #tpu.memory_space<vmem>>, vector<1x8x128xf32>
      tpu.vector_store %arg3[%c0_25, %c0_26, %c0_27], %41 {strides = array<i32>} : memref<1x8x128xf32, #tpu.memory_space<vmem>>, vector<1x8x128xf32>,
      %cst_28 = arith.constant 0.000000e+00 : f32
      %43 = vector.broadcast %cst_28 : f32 to vector<1x8x128xf32>
      %c0_29 = arith.constant 0 : index
      %c0_30 = arith.constant 0 : index
      %c0_31 = arith.constant 0 : index
      %44 = vector.load %arg4[%c0_29, %c0_30, %c0_31] : memref<1x8x128xf32, #tpu.memory_space<vmem>>, vector<1x8x128xf32>
      tpu.vector_store %arg4[%c0_29, %c0_30, %c0_31], %43 {strides = array<i32>} : memref<1x8x128xf32, #tpu.memory_space<vmem>>, vector<1x8x128xf32>,
    } else {
    }
    %c0 = arith.constant 0 : index
    %c0_1 = arith.constant 0 : index
    %3 = vector.load %arg1[%c0, %c0_1] : memref<8x128xf32, #tpu.memory_space<vmem>>, vector<8x128xf32>
    %c0_2 = arith.constant 0 : index
    %c0_3 = arith.constant 0 : index
    %4 = vector.load %arg2[%c0_2, %c0_3] : memref<8x128xf32, #tpu.memory_space<vmem>>, vector<8x128xf32>
    %5 = tpu.iota {dimensions = array<i32: 2>} : vector<1x8x128xi32>
    %c128_i32 = arith.constant 128 : i32
    %c0_i32_4 = arith.constant 0 : i32
    %6 = arith.cmpi eq, %c128_i32, %c0_i32_4 : i32
    %c1_i32 = arith.constant 1 : i32
    %7 = arith.select %6, %c1_i32, %c128_i32 : i32
    %8 = arith.remsi %arg0, %7 : i32
    %c0_i32_5 = arith.constant 0 : i32
    %9 = arith.cmpi ne, %8, %c0_i32_5 : i32
    %c0_i32_6 = arith.constant 0 : i32
    %10 = arith.cmpi slt, %8, %c0_i32_6 : i32
    %c0_i32_7 = arith.constant 0 : i32
    %11 = arith.cmpi slt, %7, %c0_i32_7 : i32
    %12 = arith.xori %10, %11 : i1
    %13 = arith.andi %12, %9 : i1
    %14 = arith.addi %8, %7 : i32
    %15 = arith.select %13, %14, %8 : i32
    %16 = vector.broadcast %15 : i32 to vector<1x8x128xi32>
    %17 = arith.cmpi eq, %5, %16 : vector<1x8x128xi32>
    %18 = arith.subf %3, %4 : vector<8x128xf32>
    %19 = arith.mulf %18, %18 : vector<8x128xf32>
    %cst = arith.constant dense<0.000000e+00> : vector<8xf32>
    %20 = vector.multi_reduction <add>, %19, %cst [1] : vector<8x128xf32> to vector<8xf32>
    %21 = vector.shape_cast %20 : vector<8xf32> to vector<8x1xf32>
    %cst_8 = arith.constant dense<0.000000e+00> : vector<1xf32>
    %22 = vector.multi_reduction <add>, %21, %cst_8 [0] : vector<8x1xf32> to vector<1xf32>
    %23 = vector.shape_cast %22 : vector<1xf32> to vector<1x1xf32>
    %24 = math.sqrt %21 : vector<8x1xf32>
    %cst_9 = arith.constant dense<0.000000e+00> : vector<1xf32>
    %25 = vector.multi_reduction <add>, %24, %cst_9 [0] : vector<8x1xf32> to vector<1xf32>
    %26 = vector.shape_cast %25 : vector<1xf32> to vector<1x1xf32>
    %c0_10 = arith.constant 0 : index
    %c0_11 = arith.constant 0 : index
    %c0_12 = arith.constant 0 : index
    %27 = vector.load %arg3[%c0_10, %c0_11, %c0_12] : memref<1x8x128xf32, #tpu.memory_space<vmem>>, vector<1x8x128xf32>
    %cst_13 = arith.constant 0.000000e+00 : f32
    %28 = vector.shape_cast %23 : vector<1x1xf32> to vector<1x1x1xf32>
    %29 = vector.broadcast %28 : vector<1x1x1xf32> to vector<1x8x128xf32>
    %30 = vector.broadcast %cst_13 : f32 to vector<1x8x128xf32>
    %31 = arith.select %17, %29, %30 : vector<1x8x128xi1>, vector<1x8x128xf32>
    %32 = arith.addf %27, %31 : vector<1x8x128xf32>
    %c0_14 = arith.constant 0 : index
    %c0_15 = arith.constant 0 : index
    %c0_16 = arith.constant 0 : index
    %33 = vector.load %arg3[%c0_14, %c0_15, %c0_16] : memref<1x8x128xf32, #tpu.memory_space<vmem>>, vector<1x8x128xf32>
    tpu.vector_store %arg3[%c0_14, %c0_15, %c0_16], %32 {strides = array<i32>} : memref<1x8x128xf32, #tpu.memory_space<vmem>>, vector<1x8x128xf32>,
    %c0_17 = arith.constant 0 : index
    %c0_18 = arith.constant 0 : index
    %c0_19 = arith.constant 0 : index
    %34 = vector.load %arg4[%c0_17, %c0_18, %c0_19] : memref<1x8x128xf32, #tpu.memory_space<vmem>>, vector<1x8x128xf32>
    %cst_20 = arith.constant 0.000000e+00 : f32
    %35 = vector.shape_cast %26 : vector<1x1xf32> to vector<1x1x1xf32>
    %36 = vector.broadcast %35 : vector<1x1x1xf32> to vector<1x8x128xf32>
    %37 = vector.broadcast %cst_20 : f32 to vector<1x8x128xf32>
    %38 = arith.select %17, %36, %37 : vector<1x8x128xi1>, vector<1x8x128xf32>
    %39 = arith.addf %34, %38 : vector<1x8x128xf32>
    %c0_21 = arith.constant 0 : index
    %c0_22 = arith.constant 0 : index
    %c0_23 = arith.constant 0 : index
    %40 = vector.load %arg4[%c0_21, %c0_22, %c0_23] : memref<1x8x128xf32, #tpu.memory_space<vmem>>, vector<1x8x128xf32>
    tpu.vector_store %arg4[%c0_21, %c0_22, %c0_23], %39 {strides = array<i32>} : memref<1x8x128xf32, #tpu.memory_space<vmem>>, vector<1x8x128xf32>,
    return
  }
  func.func @transform_0(%arg0: i32) -> (i32, i32) {
    %c0_i32 = arith.constant 0 : i32
    %c0_i32_0 = arith.constant 0 : i32
    return %arg0, %c0_i32 : i32, i32
  }
  func.func @transform_1(%arg0: i32) -> (i32, i32) {
    %c0_i32 = arith.constant 0 : i32
    %c0_i32_0 = arith.constant 0 : i32
    return %arg0, %c0_i32 : i32, i32
  }
  func.func @transform_2(%arg0: i32) -> (i32, i32, i32) {
    %c0_i32 = arith.constant 0 : i32
    %c0_i32_0 = arith.constant 0 : i32
    %c0_i32_1 = arith.constant 0 : i32
    %c0_i32_2 = arith.constant 0 : i32
    return %c0_i32, %c0_i32_0, %c0_i32_1 : i32, i32, i32
  }
  func.func @transform_3(%arg0: i32) -> (i32, i32, i32) {
    %c0_i32 = arith.constant 0 : i32
    %c0_i32_0 = arith.constant 0 : i32
    %c0_i32_1 = arith.constant 0 : i32
    %c0_i32_2 = arith.constant 0 : i32
    return %c0_i32, %c0_i32_0, %c0_i32_1 : i32, i32, i32
  }
}

</mosaic_0001>

<llo_original>
// kernel: tpu_custom_call.1
$region0: #{tpu_custom_call.1}
  #allocation0 [shape = 'u32[]', space=smem, size = 0x4, offset = 0x4, fixed_abs, tag = 'smem constant byte address 0x4 - core index']
  #allocation1 [shape = 'u32[144,128]{1,0:T(1,128)}', space=vmem, size = 0x12000, scoped, tag = 'internal scratch']
  %s0 = inlined_call_operand.hbm [shape: f32[8,128], index: 0, kind: input, shape index: {}]
  %s1 = inlined_call_operand.hbm [shape: f32[8,128], index: 1, kind: input, shape index: {}]
  %s2 = inlined_call_operand.hbm [shape: f32[1,8,128], index: 2, kind: output, shape index: {0}]
  %s3 = inlined_call_operand.hbm [shape: f32[1,8,128], index: 3, kind: output, shape index: {1}]
  %4 = xla_tuple %s2, %s3
  %s5 = sld [smem:[#allocation0]]
  $region38: #{tpu_custom_call.1} parent=0
    _
  %s7 = ssub.s32 1, %s5
  %s8 = scalar_select 0, %s7, %s5
  $region1: #{tpu_custom_call.1} parent=0
    #allocation2 [shape = 'u8[4096]{0}', space=vmem, size = 0x1000, scoped, tag = 'input window, operand 0, single buffered']
    #allocation3 [shape = 's32[1]{0}', space=sflag, size = 0x4, scoped, tag = 'scoped memory for tpu_custom_call.1']
    #allocation4 [shape = 's32[1]{0}', space=sflag, size = 0x4, scoped, tag = 'scoped memory for tpu_custom_call.1']
    #allocation5 [shape = 'u8[4096]{0}', space=vmem, size = 0x1000, scoped, tag = 'input window, operand 1, single buffered']
    #allocation6 [shape = 's32[1]{0}', space=sflag, size = 0x4, scoped, tag = 'scoped memory for tpu_custom_call.1']
    #allocation7 [shape = 'u8[4096]{0}', space=vmem, size = 0x1000, scoped, tag = 'output window, operand 0, single buffered']
    #allocation8 [shape = 'u8[4096]{0}', space=vmem, size = 0x1000, scoped, tag = 'output window, operand 1, single buffered']
    #allocation9 [shape = 's32[1]{0}', space=sflag, size = 0x4, scoped, tag = 'scoped memory for tpu_custom_call.1']
    %9 = vsyncpa [#allocation3], 0
    %10 = vsyncpa [#allocation6], 0
    %11 = vsyncpa [#allocation4], 0
    %12 = vsyncpa [#allocation9], 0
    // Predicated region
    $region2: #{tpu_custom_call.1} parent=1 // pred_check
      _
    $region3: #{tpu_custom_call.1} parent=1 // pred_check_branch
      %14 = sbr.rel (0) target = $region5
    $region4: #{tpu_custom_call.1} parent=1 // pred_region
      %s16 = ssub.s32 128, 128
      %17 = vsyncadd [#allocation3], %s16
      %s19 = sshll.u32 [#allocation2], 4
      %s20 = int_to_ptr.vmem [resolvable:$true] %s19
      %22 = dma.hbm_to_vmem [thread:$0]  %s0, 128, %s20, [#allocation3]
    $region5: #{tpu_custom_call.1} parent=1 // pred_fallthru
      _
    // Predicated region
    $region6: #{tpu_custom_call.1} parent=1 // pred_check
      _
    $region7: #{tpu_custom_call.1} parent=1 // pred_check_branch
      %24 = sbr.rel (0) target = $region9
    $region8: #{tpu_custom_call.1} parent=1 // pred_region
      %s26 = ssub.s32 128, 128
      %27 = vsyncadd [#allocation6], %s26
      %s29 = sshll.u32 [#allocation5], 4
      %s30 = int_to_ptr.vmem [resolvable:$true] %s29
      %32 = dma.hbm_to_vmem [thread:$0]  %s1, 128, %s30, [#allocation6]
    $region9: #{tpu_custom_call.1} parent=1 // pred_fallthru
      _
    // Predicated region
    $region10: #{tpu_custom_call.1} parent=1 // pred_check
      _
    $region11: #{tpu_custom_call.1} parent=1 // pred_check_branch
      %34 = sbr.rel (0) target = $region13
    $region12: #{tpu_custom_call.1} parent=1 // pred_region
      %35 = dma.done [#allocation3], 128
    $region13: #{tpu_custom_call.1} parent=1 // pred_fallthru
      _
    // Predicated region
    $region14: #{tpu_custom_call.1} parent=1 // pred_check
      _
    $region15: #{tpu_custom_call.1} parent=1 // pred_check_branch
      %37 = sbr.rel (0) target = $region17
    $region16: #{tpu_custom_call.1} parent=1 // pred_region
      %38 = dma.done [#allocation6], 128
    $region17: #{tpu_custom_call.1} parent=1 // pred_fallthru
      _
    %p39 = scmp.eq.s32.totalorder 0, 0
    // Predicated region
    $region18: #{tpu_custom_call.1} parent=1 // pred_check
      %p40 = pneg %p39
    $region19: #{tpu_custom_call.1} parent=1 // pred_check_branch
      %42 = sbr.rel (%p40) target = $region21
    $region20: #{tpu_custom_call.1} parent=1 // pred_region
      %43 = vst [vmem:[#allocation7] sm:$0xff] 0.0
      %44 = vst [vmem:[#allocation8] sm:$0xff] 0.0
    $region21: #{tpu_custom_call.1} parent=1 // pred_fallthru
      _
    %v45 = vld [vmem:[#allocation2] sm:$0xff]
    %v46 = vld [vmem:[#allocation5] sm:$0xff]
    %v47 = vlaneseq
    %v48 = vand.u32 %v47, 127
    %s49 = ssub.s32 0, 0
    %s50 = ssub.s32 0, 0
    %p51 = scmp.ne.s32.totalorder 0, 0
    %p52 = scmp.lt.s32.totalorder 0, 0
    %p53 = pnand %p52, %p51
    %p54 = pneg %p53
    %s55 = sadd.s32 0, 128
    %s56 = scalar_select %p54, %s55, 0
    %v57 = vstv %s56
    %vm58 = vcmp.eq.s32.totalorder %v48, %v57
    %v59 = vsub.f32 %v45, %v46
    %v60 = vmul.f32 %v59, %v59
    %61 = vadd.xlane.f32.xlu0 %v60
    %v62 = vpop.xlane.xlu0 %61
    %v63 = vrot.slane %v62, 4
    %v64 = vadd.f32 %v62, %v63
    %v65 = vrot.slane %v64, 2
    %v66 = vadd.f32 %v64, %v65
    %v67 = vrot.slane %v66, 1
    %v68 = vadd.f32 %v66, %v67
    %v69 = vrsqrt.pop %v62
    %v70 = vmul.f32 %v62, %v69
    %vm71 = vcmp.eq.f32.partialorder %v62, inf
    %v72 = vsel %vm71, %v62, %v70
    %vm73 = vcmp.eq.f32.partialorder %v62, 0.0
    %v74 = vand.u32 %v62, 2147483648
    %v75 = vsel %vm73, %v74, %v72
    %v76 = vrot.slane %v75, 4
    %v77 = vadd.f32 %v75, %v76
    %v78 = vrot.slane %v77, 2
    %v79 = vadd.f32 %v77, %v78
    %v80 = vrot.slane %v79, 1
    %v81 = vadd.f32 %v79, %v80
    %v82 = vld [vmem:[#allocation7] sm:$0xff]
    %v83 = vsel %vm58, %v68, 0.0
    %v84 = vadd.f32 %v82, %v83
    %85 = vst [vmem:[#allocation7] sm:$0xff] %v84
    %v86 = vld [vmem:[#allocation8] sm:$0xff]
    %v87 = vsel %vm58, %v81, 0.0
    %v88 = vadd.f32 %v86, %v87
    %89 = vst [vmem:[#allocation8] sm:$0xff] %v88
    // Predicated region
    $region22: #{tpu_custom_call.1} parent=1 // pred_check
      _
    $region23: #{tpu_custom_call.1} parent=1 // pred_check_branch
      %91 = sbr.rel (0) target = $region25
    $region24: #{tpu_custom_call.1} parent=1 // pred_region
      %s93 = ssub.s32 128, 128
      %94 = vsyncadd [#allocation4], %s93
      %s96 = sshll.u32 [#allocation7], 4
      %s97 = int_to_ptr.vmem [resolvable:$true] %s96
      %99 = dma.vmem_to_hbm [thread:$0]  %s97, 128, %s2, [#allocation4]
    $region25: #{tpu_custom_call.1} parent=1 // pred_fallthru
      _
    // Predicated region
    $region26: #{tpu_custom_call.1} parent=1 // pred_check
      _
    $region27: #{tpu_custom_call.1} parent=1 // pred_check_branch
      %101 = sbr.rel (0) target = $region29
    $region28: #{tpu_custom_call.1} parent=1 // pred_region
      %s103 = ssub.s32 128, 128
      %104 = vsyncadd [#allocation9], %s103
      %s106 = sshll.u32 [#allocation8], 4
      %s107 = int_to_ptr.vmem [resolvable:$true] %s106
      %109 = dma.vmem_to_hbm [thread:$0]  %s107, 128, %s3, [#allocation9]
    $region29: #{tpu_custom_call.1} parent=1 // pred_fallthru
      _
    // Predicated region
    $region30: #{tpu_custom_call.1} parent=1 // pred_check
      _
    $region31: #{tpu_custom_call.1} parent=1 // pred_check_branch
      %111 = sbr.rel (0) target = $region33
    $region32: #{tpu_custom_call.1} parent=1 // pred_region
      %112 = dma.done [#allocation4], 128
    $region33: #{tpu_custom_call.1} parent=1 // pred_fallthru
      _
    // Predicated region
    $region34: #{tpu_custom_call.1} parent=1 // pred_check
      _
    $region35: #{tpu_custom_call.1} parent=1 // pred_check_branch
      %114 = sbr.rel (0) target = $region37
    $region36: #{tpu_custom_call.1} parent=1 // pred_region
      %115 = dma.done [#allocation9], 128
    $region37: #{tpu_custom_call.1} parent=1 // pred_fallthru
      _
    %116 = vsyncpa [#allocation3], 1
    %117 = vsyncpa [#allocation6], 1
    %118 = vsyncpa [#allocation4], 1
    %119 = vsyncpa [#allocation9], 1

</llo_original>
